<compile_context>
chip_gen: v6e
topology: v6e:2x2x1
jax: 0.10.0
libtpu: 0.0.40
codegen_flags: <defaults>
</compile_context>

<pallas_src>
import functools
import math

import jax
import jax.numpy as jnp
from jax.experimental import pallas as pl
from jax.experimental.pallas import tpu as pltpu

_VMEM_LIMIT = 48 * 1024 * 1024  # <= v7x physical (64 MiB), generous on v5e/v6e


def _pick_tile(dim, pref, align):
    """Largest tile <= pref that divides dim and is align-multiple, else full dim."""
    if dim <= pref:
        return dim
    t = pref - (pref % align)
    while t >= align:
        if dim % t == 0:
            return t
        t -= align
    return dim  # ragged fallback (see TODO above)


# ----------------------------------------------------------------------------
# Kernel 1: fused RMSNorm + Q/K/V projections + RoPE + 1/sqrt(d_head) scale
#   Weights pre-transposed (d_in, d_out) bf16; wq/wk columns pre-permuted to a
#   per-head rotate-half layout so RoPE needs no lane permutation in-kernel.
# ----------------------------------------------------------------------------
def _rmsnorm_qkv_rope_kernel(x_ref, g_ref, cos_ref, sin_ref,
                             wq_ref, wk_ref, wv_ref,
                             q_ref, k_ref, v_ref, h_sc,
                             *, eps, d_head, scale):
    # RMSNorm computed once per row tile (j == 0), reused for every N tile.
    @pl.when(pl.program_id(1) == 0)
    def _():
        x = x_ref[...]                                           # (tm, K) f32
        inv_rms = jax.lax.rsqrt(jnp.mean(x * x, axis=-1, keepdims=True) + eps)
        h_sc[...] = ((x * inv_rms) * g_ref[...]).astype(jnp.bfloat16)

    h = h_sc[...]                                                # (tm, K) bf16
    q = jnp.dot(h, wq_ref[...], preferred_element_type=jnp.float32) * scale
    k = jnp.dot(h, wk_ref[...], preferred_element_type=jnp.float32)
    v = jnp.dot(h, wv_ref[...], preferred_element_type=jnp.float32)
    v_ref[...] = v.astype(v_ref.dtype)

    # RoPE in rotate-half layout: per head, [even | odd] halves.
    cos = cos_ref[...]
    sin = sin_ref[...]
    dh2 = d_head // 2
    for hh in range(q.shape[1] // d_head):
        c0 = hh * d_head
        c = cos[:, c0:c0 + dh2]                   # cos packed identically per half
        s = sin[:, c0:c0 + dh2]
        qa, qb = q[:, c0:c0 + dh2], q[:, c0 + dh2:c0 + d_head]
        ka, kb = k[:, c0:c0 + dh2], k[:, c0 + dh2:c0 + d_head]
        q_ref[:, c0:c0 + dh2] = (qa * c - qb * s).astype(q_ref.dtype)
        q_ref[:, c0 + dh2:c0 + d_head] = (qb * c + qa * s).astype(q_ref.dtype)
        k_ref[:, c0:c0 + dh2] = (ka * c - kb * s).astype(k_ref.dtype)
        k_ref[:, c0 + dh2:c0 + d_head] = (kb * c + ka * s).astype(k_ref.dtype)


def rmsnorm_qkv_rope(x, g, cos_g, sin_g, wq_t, wk_t, wv_t, d_head,
                     *, eps=1e-5, tm=256, tn=256):
    M, K = x.shape
    N = wq_t.shape[1]
    tm = _pick_tile(M, tm, 8)
    tn = _pick_tile(N, tn, 128)
    if tn % d_head:
        tn = N                                   # head slabs must stay inside a tile
    scale = 1.0 / math.sqrt(d_head)
    g2d = g.reshape(1, K).astype(jnp.float32)
    x_spec = pl.BlockSpec((tm, K), lambda i, j: (i, 0))
    g_spec = pl.BlockSpec((1, K), lambda i, j: (0, 0))
    t_spec = pl.BlockSpec((tm, tn), lambda i, j: (i, j))   # cos / sin tables
    w_spec = pl.BlockSpec((K, tn), lambda i, j: (0, j))
    o_spec = pl.BlockSpec((tm, tn), lambda i, j: (i, j))
    out = jax.ShapeDtypeStruct((M, N), jnp.bfloat16)
    return pl.pallas_call(
        functools.partial(_rmsnorm_qkv_rope_kernel, eps=eps, d_head=d_head,
                          scale=scale),
        out_shape=(out, out, out),
        grid=(M // tm, N // tn),
        in_specs=[x_spec, g_spec, t_spec, t_spec, w_spec, w_spec, w_spec],
        out_specs=(o_spec, o_spec, o_spec),
        scratch_shapes=[pltpu.VMEM((tm, K), jnp.bfloat16)],
        compiler_params=pltpu.CompilerParams(
            dimension_semantics=("parallel", "arbitrary"),
            vmem_limit_bytes=_VMEM_LIMIT),
    )(x, g2d, cos_g, sin_g, wq_t, wk_t, wv_t)


# ----------------------------------------------------------------------------
# Kernel 2: fused RMSNorm + w1/w3 matmuls + SwiGLU gate (bf16 output)
# ----------------------------------------------------------------------------
def _rmsnorm_swiglu_kernel(x_ref, g_ref, w1_ref, w3_ref, o_ref, h_sc, *, eps):
    @pl.when(pl.program_id(1) == 0)
    def _():
        x = x_ref[...]
        inv_rms = jax.lax.rsqrt(jnp.mean(x * x, axis=-1, keepdims=True) + eps)
        h_sc[...] = ((x * inv_rms) * g_ref[...]).astype(jnp.bfloat16)

    h = h_sc[...]
    a = jnp.dot(h, w1_ref[...], preferred_element_type=jnp.float32)
    b = jnp.dot(h, w3_ref[...], preferred_element_type=jnp.float32)
    o_ref[...] = (a * jax.nn.sigmoid(a) * b).astype(o_ref.dtype)     # SiLU(a)*b


def rmsnorm_swiglu(x, g, w1_t, w3_t, *, eps=1e-5, tm=256, tn=256):
    M, K = x.shape
    N = w1_t.shape[1]
    tm = _pick_tile(M, tm, 8)
    tn = _pick_tile(N, tn, 128)
    g2d = g.reshape(1, K).astype(jnp.float32)
    return pl.pallas_call(
        functools.partial(_rmsnorm_swiglu_kernel, eps=eps),
        out_shape=jax.ShapeDtypeStruct((M, N), jnp.bfloat16),
        grid=(M // tm, N // tn),
        in_specs=[pl.BlockSpec((tm, K), lambda i, j: (i, 0)),
                  pl.BlockSpec((1, K), lambda i, j: (0, 0)),
                  pl.BlockSpec((K, tn), lambda i, j: (0, j)),
                  pl.BlockSpec((K, tn), lambda i, j: (0, j))],
        out_specs=pl.BlockSpec((tm, tn), lambda i, j: (i, j)),
        scratch_shapes=[pltpu.VMEM((tm, K), jnp.bfloat16)],
        compiler_params=pltpu.CompilerParams(
            dimension_semantics=("parallel", "arbitrary"),
            vmem_limit_bytes=_VMEM_LIMIT),
    )(x, g2d, w1_t, w3_t)


# ----------------------------------------------------------------------------
# Kernel 3: K-tiled matmul with f32 accumulator + fused residual add
#   x arrives bf16 (attention / SwiGLU output); residual stream stays f32.
# ----------------------------------------------------------------------------
def _linear_residual_kernel(x_ref, w_ref, r_ref, o_ref, acc_ref):
    k_i = pl.program_id(2)

    @pl.when(k_i == 0)
    def _():
        acc_ref[...] = jnp.zeros_like(acc_ref)

    acc_ref[...] += jnp.dot(x_ref[...], w_ref[...],
                            preferred_element_type=jnp.float32)

    @pl.when(k_i == pl.num_programs(2) - 1)
    def _():
        o_ref[...] = acc_ref[...] + r_ref[...]


def linear_residual(x, w_t, res, *, tm=256, tn=256, tk=512):
    M, K = x.shape
    K2, N = w_t.shape
    assert K == K2 and res.shape == (M, N)
    tm = _pick_tile(M, tm, 8)
    tn = _pick_tile(N, tn, 128)
    tk = _pick_tile(K, tk, 128)
    return pl.pallas_call(
        _linear_residual_kernel,
        out_shape=jax.ShapeDtypeStruct((M, N), jnp.float32),
        grid=(M // tm, N // tn, K // tk),
        in_specs=[
            pl.BlockSpec((tm, tk), lambda i, j, k: (i, k)),
            pl.BlockSpec((tk, tn), lambda i, j, k: (k, j)),
            pl.BlockSpec((tm, tn), lambda i, j, k: (i, j)),
        ],
        out_specs=pl.BlockSpec((tm, tn), lambda i, j, k: (i, j)),
        scratch_shapes=[pltpu.VMEM((tm, tn), jnp.float32)],
        compiler_params=pltpu.CompilerParams(
            dimension_semantics=("parallel", "parallel", "arbitrary"),
            vmem_limit_bytes=_VMEM_LIMIT),
    )(x, w_t, res)


# ----------------------------------------------------------------------------
# Kernel 4: flash-style causal attention, Q-tiled, masked KV tiles skipped.
#   Q already carries RoPE + 1/sqrt(d_head); K carries RoPE; all bf16.
# ----------------------------------------------------------------------------
def _flash_attn_kernel(q_ref, k_ref, v_ref, o_ref, m_sc, l_sc, acc_sc,
                       *, num_heads):
    qi = pl.program_id(1)
    ki = pl.program_id(2)
    TQ, D = q_ref.shape[1], q_ref.shape[2]
    TK = k_ref.shape[1]
    Dh = D // num_heads

    @pl.when(ki == 0)
    def _():
        m_sc[...] = jnp.full_like(m_sc, -1e30)
        l_sc[...] = jnp.zeros_like(l_sc)
        acc_sc[...] = jnp.zeros_like(acc_sc)

    q_start = qi * TQ
    kv_start = ki * TK

    # Skip KV tiles entirely above the causal diagonal (their DMA is already
    # elided by the clamped index_map in the wrapper).
    @pl.when(kv_start <= q_start + TQ - 1)
    def _():
        q = q_ref[0]                                             # (TQ, D) bf16
        k = k_ref[0]                                             # (TK, D) bf16
        v = v_ref[0]                                             # (TK, D) bf16
        row = jax.lax.broadcasted_iota(jnp.int32, (TQ, TK), 0) + q_start
        col = jax.lax.broadcasted_iota(jnp.int32, (TQ, TK), 1) + kv_start
        causal = col <= row

        for h in range(num_heads):
            sl = slice(h * Dh, (h + 1) * Dh)
            s = jax.lax.dot_general(q[:, sl], k[:, sl],
                                    (((1,), (1,)), ((), ())),
                                    preferred_element_type=jnp.float32)
            s = jnp.where(causal, s, -1e30)
            m_prev = m_sc[:, h:h + 1]
            m_new = jnp.maximum(m_prev, jnp.max(s, axis=-1, keepdims=True))
            alpha = jnp.exp(m_prev - m_new)
            p = jnp.exp(s - m_new)
            l_sc[:, h:h + 1] = alpha * l_sc[:, h:h + 1] + jnp.sum(
                p, axis=-1, keepdims=True)
            acc_sc[:, sl] = alpha * acc_sc[:, sl] + jnp.dot(
                p.astype(jnp.bfloat16), v[:, sl],
                preferred_element_type=jnp.float32)
            m_sc[:, h:h + 1] = m_new

    @pl.when(ki == pl.num_programs(2) - 1)
    def _():
        inv_l = pl.reciprocal(l_sc[...], approx=True)            # (TQ, H) on EUP
        for h in range(num_heads):
            sl = slice(h * Dh, (h + 1) * Dh)
            acc_sc[:, sl] = acc_sc[:, sl] * inv_l[:, h:h + 1]
        o_ref[0] = acc_sc[...].astype(o_ref.dtype)


def causal_attention(q, k, v, num_heads, *, tile=256):
    B, S, D = q.shape
    T = _pick_tile(S, tile, 8)
    nT = S // T
    q_spec = pl.BlockSpec((1, T, D), lambda b, qi, ki: (b, qi, 0))
    # Clamp KV block index at the causal diagonal: steps past it re-use the same
    # block (no new DMA) and their compute is skipped in-kernel.
    kv_spec = pl.BlockSpec((1, T, D),
                           lambda b, qi, ki: (b, jnp.minimum(ki, qi), 0))
    return pl.pallas_call(
        functools.partial(_flash_attn_kernel, num_heads=num_heads),
        out_shape=jax.ShapeDtypeStruct((B, S, D), jnp.bfloat16),
        grid=(B, nT, nT),
        in_specs=[q_spec, kv_spec, kv_spec],
        out_specs=q_spec,
        scratch_shapes=[
            pltpu.VMEM((T, num_heads), jnp.float32),   # running max  m
            pltpu.VMEM((T, num_heads), jnp.float32),   # running sum  l
            pltpu.VMEM((T, D), jnp.float32),           # running output acc
        ],
        compiler_params=pltpu.CompilerParams(
            dimension_semantics=("parallel", "parallel", "arbitrary"),
            vmem_limit_bytes=_VMEM_LIMIT),
    )(q, k, v)


# ----------------------------------------------------------------------------
# Plain-JAX glue: RoPE tables (rotate-half packing), weight-column permutation
# ----------------------------------------------------------------------------
def rope_tables(theta, d_head, num_heads, max_seq_len):
    pos = jnp.arange(max_seq_len, dtype=jnp.float32)[:, None]
    kk = jnp.arange(d_head // 2, dtype=jnp.float32)[None, :]
    ang = pos / (theta ** (2.0 * kk / d_head))                 # (L, d_head//2)
    cos = jnp.cos(ang)
    sin = jnp.sin(ang)
    cos_head = jnp.concatenate([cos, cos], axis=-1)            # (L, d_head)
    sin_head = jnp.concatenate([sin, sin], axis=-1)
    return (jnp.tile(cos_head, (1, num_heads)),                # (L, d_model)
            jnp.tile(sin_head, (1, num_heads)))


def _head_deinterleave_perm(d_model, num_heads):
    # Per head: even dims first, then odd dims (rotate-half layout).
    d_head = d_model // num_heads
    idx = []
    for h in range(num_heads):
        base = h * d_head
        idx += [base + 2 * r for r in range(d_head // 2)]
        idx += [base + 2 * r + 1 for r in range(d_head // 2)]
    return jnp.asarray(idx, dtype=jnp.int32)


# ----------------------------------------------------------------------------
# Parameter init (matches PyTorch module semantics; weights pre-transposed bf16)
# ----------------------------------------------------------------------------
def _trunc_normal(key, shape, std):
    return std * jax.random.truncated_normal(key, -3.0, 3.0, shape, jnp.float32)


def _init_linear_t(key, d_in, d_out):
    std = math.sqrt(2.0 / (d_in + d_out))
    w = _trunc_normal(key, (d_out, d_in), std)                 # PyTorch (d_out, d_in)
    return jnp.asarray(w.T, dtype=jnp.bfloat16)                # pre-transposed, bf16


def init_params(key, d_model, num_heads, d_ff):
    ks = jax.random.split(key, 7)
    perm = _head_deinterleave_perm(d_model, num_heads)
    wq_t = _init_linear_t(ks[0], d_model, d_model)
    wk_t = _init_linear_t(ks[1], d_model, d_model)
    return {
        "ln1": jnp.ones((d_model,), jnp.float32),
        "ln2": jnp.ones((d_model,), jnp.float32),
        # q/k output columns de-interleaved per head: scores & output invariant.
        "wq_t": wq_t[:, perm],
        "wk_t": wk_t[:, perm],
        "wv_t": _init_linear_t(ks[2], d_model, d_model),
        "wo_t": _init_linear_t(ks[3], d_model, d_model),
        "w1_t": _init_linear_t(ks[4], d_model, d_ff),
        "w3_t": _init_linear_t(ks[5], d_model, d_ff),
        "w2_t": _init_linear_t(ks[6], d_ff, d_model),
    }


# ----------------------------------------------------------------------------
# Transformer block forward: z = y + ffn(ln2(y)), y = x + attn(ln1(x), pos)
# ----------------------------------------------------------------------------
def transformer_block(x, params, cos_tab, sin_tab, token_positions, num_heads,
                      eps=1e-5):
    B, S, D = x.shape
    M = B * S
    d_head = D // num_heads
    xf = x.reshape(M, D).astype(jnp.float32)

    cos_g = cos_tab[token_positions].reshape(M, D)             # gather by position
    sin_g = sin_tab[token_positions].reshape(M, D)

    # (1) fused RMSNorm(ln1) + Q/K/V + RoPE + 1/sqrt(d_head) scale (bf16 out)
    q, k, v = rmsnorm_qkv_rope(xf, params["ln1"], cos_g, sin_g,
                               params["wq_t"], params["wk_t"], params["wv_t"],
                               d_head, eps=eps)

    # (2) Q-tiled flash-style causal attention (masked KV tiles skipped)
    att = causal_attention(q.reshape(B, S, D), k.reshape(B, S, D),
                           v.reshape(B, S, D), num_heads)

    # (3) output projection + residual add (K-tiled f32 accumulator)
    y = linear_residual(att.reshape(M, D), params["wo_t"], xf)

    # (4) fused RMSNorm(ln2) + w1/w3 + SwiGLU gate (bf16 out)
    g = rmsnorm_swiglu(y, params["ln2"], params["w1_t"], params["w3_t"], eps=eps)

    # (5) w2 projection + residual add
    z = linear_residual(g, params["w2_t"], y)
    return z.reshape(B, S, D)


# ----------------------------------------------------------------------------
if __name__ == "__main__":
    d_model = 32
    num_heads = 4
    d_ff = 64
    max_seq_len = 16
    theta = 10000.0
    batch, seq = 2, 8

    root = jax.random.PRNGKey(0)
    k_params, k_x = jax.random.split(root)
    params = init_params(k_params, d_model, num_heads, d_ff)
    cos_tab, sin_tab = rope_tables(theta, d_model // num_heads, num_heads,
                                   max_seq_len)

    x = jax.random.normal(k_x, (batch, seq, d_model), jnp.float32)
    token_positions = jnp.broadcast_to(jnp.arange(seq, dtype=jnp.int32),
                                       (batch, seq))

    out = transformer_block(x, params, cos_tab, sin_tab, token_positions,
                            num_heads)
    out = jax.block_until_ready(out)
    assert out.shape == (batch, seq, d_model)
    assert bool(jnp.all(jnp.isfinite(out)))
    print("KERNEL_OK")
</pallas_src>

<mosaic_0001>
module attributes {stable_mosaic.version = 11 : i64} {
  func.func @_rmsnorm_qkv_rope_kernel(%arg0: i32, %arg1: i32, %arg2: memref<16x32xf32, #tpu.memory_space<vmem>>, %arg3: memref<1x32xf32, #tpu.memory_space<vmem>>, %arg4: memref<16x32xf32, #tpu.memory_space<vmem>>, %arg5: memref<16x32xf32, #tpu.memory_space<vmem>>, %arg6: memref<32x32xbf16, #tpu.memory_space<vmem>>, %arg7: memref<32x32xbf16, #tpu.memory_space<vmem>>, %arg8: memref<32x32xbf16, #tpu.memory_space<vmem>>, %arg9: memref<16x32xbf16, #tpu.memory_space<vmem>>, %arg10: memref<16x32xbf16, #tpu.memory_space<vmem>>, %arg11: memref<16x32xbf16, #tpu.memory_space<vmem>>, %arg12: memref<16x32xbf16, #tpu.memory_space<vmem>>) attributes {dimension_semantics = [#tpu.dimension_semantics<parallel>, #tpu.dimension_semantics<arbitrary>], iteration_bounds = array<i64: 1, 1>, scalar_prefetch = 0 : i64, scratch_operands = 1 : i64, tpu.core_type = #tpu.core_type<tc>, window_params = [{transform_indices = @transform_0, window_bounds = array<i64: 16, 32>}, {pipeline_mode = #tpu.pipeline_mode<synchronous>, transform_indices = @transform_1, window_bounds = array<i64: 1, 32>}, {transform_indices = @transform_2, window_bounds = array<i64: 16, 32>}, {transform_indices = @transform_3, window_bounds = array<i64: 16, 32>}, {transform_indices = @transform_4, window_bounds = array<i64: 32, 32>}, {transform_indices = @transform_5, window_bounds = array<i64: 32, 32>}, {transform_indices = @transform_6, window_bounds = array<i64: 32, 32>}, {transform_indices = @transform_7, window_bounds = array<i64: 16, 32>}, {transform_indices = @transform_8, window_bounds = array<i64: 16, 32>}, {transform_indices = @transform_9, window_bounds = array<i64: 16, 32>}]} {
    %c0_i32 = arith.constant 0 : i32
    %0 = arith.cmpi eq, %arg1, %c0_i32 : i32
    %1 = arith.extui %0 : i1 to i32
    %c0_i32_0 = arith.constant 0 : i32
    %2 = arith.cmpi ne, %1, %c0_i32_0 : i32
    scf.if %2 {
      %c0_42 = arith.constant 0 : index
      %c0_43 = arith.constant 0 : index
      %120 = vector.load %arg2[%c0_42, %c0_43] : memref<16x32xf32, #tpu.memory_space<vmem>>, vector<16x32xf32>
      %121 = arith.mulf %120, %120 : vector<16x32xf32>
      %cst_44 = arith.constant dense<0.000000e+00> : vector<16xf32>
      %122 = vector.multi_reduction <add>, %121, %cst_44 [1] : vector<16x32xf32> to vector<16xf32>
      %123 = vector.shape_cast %122 : vector<16xf32> to vector<16x1xf32>
      %cst_45 = arith.constant 3.200000e+01 : f32
      %124 = vector.broadcast %cst_45 : f32 to vector<16x1xf32>
      %125 = arith.divf %123, %124 : vector<16x1xf32>
      %cst_46 = arith.constant 9.99999974E-6 : f32
      %126 = vector.broadcast %cst_46 : f32 to vector<16x1xf32>
      %127 = arith.addf %125, %126 : vector<16x1xf32>
      %128 = math.rsqrt %127 : vector<16x1xf32>
      %129 = vector.broadcast %128 : vector<16x1xf32> to vector<16x32xf32>
      %130 = arith.mulf %120, %129 : vector<16x32xf32>
      %c0_47 = arith.constant 0 : index
      %c0_48 = arith.constant 0 : index
      %131 = vector.load %arg3[%c0_47, %c0_48] : memref<1x32xf32, #tpu.memory_space<vmem>>, vector<1x32xf32>
      %132 = vector.broadcast %131 : vector<1x32xf32> to vector<16x32xf32>
      %133 = arith.mulf %130, %132 : vector<16x32xf32>
      %134 = arith.truncf %133 : vector<16x32xf32> to vector<16x32xbf16>
      %c0_49 = arith.constant 0 : index
      %c0_50 = arith.constant 0 : index
      %135 = vector.load %arg12[%c0_49, %c0_50] : memref<16x32xbf16, #tpu.memory_space<vmem>>, vector<16x32xbf16>
      tpu.vector_store %arg12[%c0_49, %c0_50], %134 {strides = array<i32>} : memref<16x32xbf16, #tpu.memory_space<vmem>>, vector<16x32xbf16>,
    } else {
    }
    %c0 = arith.constant 0 : index
    %c0_1 = arith.constant 0 : index
    %3 = vector.load %arg12[%c0, %c0_1] : memref<16x32xbf16, #tpu.memory_space<vmem>>, vector<16x32xbf16>
    %c0_2 = arith.constant 0 : index
    %c0_3 = arith.constant 0 : index
    %4 = vector.load %arg6[%c0_2, %c0_3] : memref<32x32xbf16, #tpu.memory_space<vmem>>, vector<32x32xbf16>
    %cst = arith.constant dense<0.000000e+00> : vector<16x32xf32>
    %5 = tpu.matmul %3, %4, %cst {dimension_numbers = #tpu.dot_dimension_numbers<[1], [0], [0], [1], [0, 0, 1, 1], [], []>} : vector<16x32xbf16>, vector<32x32xbf16>, vector<16x32xf32> -> vector<16x32xf32>
    %cst_4 = arith.constant 0.353553385 : f32
    %6 = vector.broadcast %cst_4 : f32 to vector<16x32xf32>
    %7 = arith.mulf %5, %6 : vector<16x32xf32>
    %c0_5 = arith.constant 0 : index
    %c0_6 = arith.constant 0 : index
    %8 = vector.load %arg7[%c0_5, %c0_6] : memref<32x32xbf16, #tpu.memory_space<vmem>>, vector<32x32xbf16>
    %cst_7 = arith.constant dense<0.000000e+00> : vector<16x32xf32>
    %9 = tpu.matmul %3, %8, %cst_7 {dimension_numbers = #tpu.dot_dimension_numbers<[1], [0], [0], [1], [0, 0, 1, 1], [], []>} : vector<16x32xbf16>, vector<32x32xbf16>, vector<16x32xf32> -> vector<16x32xf32>
    %c0_8 = arith.constant 0 : index
    %c0_9 = arith.constant 0 : index
    %10 = vector.load %arg8[%c0_8, %c0_9] : memref<32x32xbf16, #tpu.memory_space<vmem>>, vector<32x32xbf16>
    %cst_10 = arith.constant dense<0.000000e+00> : vector<16x32xf32>
    %11 = tpu.matmul %3, %10, %cst_10 {dimension_numbers = #tpu.dot_dimension_numbers<[1], [0], [0], [1], [0, 0, 1, 1], [], []>} : vector<16x32xbf16>, vector<32x32xbf16>, vector<16x32xf32> -> vector<16x32xf32>
    %12 = arith.truncf %11 : vector<16x32xf32> to vector<16x32xbf16>
    %c0_11 = arith.constant 0 : index
    %c0_12 = arith.constant 0 : index
    %13 = vector.load %arg11[%c0_11, %c0_12] : memref<16x32xbf16, #tpu.memory_space<vmem>>, vector<16x32xbf16>
    tpu.vector_store %arg11[%c0_11, %c0_12], %12 {strides = array<i32>} : memref<16x32xbf16, #tpu.memory_space<vmem>>, vector<16x32xbf16>,
    %c0_13 = arith.constant 0 : index
    %c0_14 = arith.constant 0 : index
    %14 = vector.load %arg4[%c0_13, %c0_14] : memref<16x32xf32, #tpu.memory_space<vmem>>, vector<16x32xf32>
    %c0_15 = arith.constant 0 : index
    %c0_16 = arith.constant 0 : index
    %15 = vector.load %arg5[%c0_15, %c0_16] : memref<16x32xf32, #tpu.memory_space<vmem>>, vector<16x32xf32>
    %16 = vector.extract_strided_slice %14 {offsets = [0, 0], sizes = [16, 4], strides = [1, 1]} : vector<16x32xf32> to vector<16x4xf32>
    %17 = vector.extract_strided_slice %15 {offsets = [0, 0], sizes = [16, 4], strides = [1, 1]} : vector<16x32xf32> to vector<16x4xf32>
    %18 = vector.extract_strided_slice %7 {offsets = [0, 0], sizes = [16, 4], strides = [1, 1]} : vector<16x32xf32> to vector<16x4xf32>
    %19 = vector.extract_strided_slice %7 {offsets = [0, 4], sizes = [16, 4], strides = [1, 1]} : vector<16x32xf32> to vector<16x4xf32>
    %20 = vector.extract_strided_slice %9 {offsets = [0, 0], sizes = [16, 4], strides = [1, 1]} : vector<16x32xf32> to vector<16x4xf32>
    %21 = vector.extract_strided_slice %9 {offsets = [0, 4], sizes = [16, 4], strides = [1, 1]} : vector<16x32xf32> to vector<16x4xf32>
    %22 = arith.mulf %18, %16 : vector<16x4xf32>
    %23 = arith.mulf %19, %17 : vector<16x4xf32>
    %24 = arith.subf %22, %23 : vector<16x4xf32>
    %25 = arith.truncf %24 : vector<16x4xf32> to vector<16x4xbf16>
    %c0_17 = arith.constant 0 : index
    %c0_18 = arith.constant 0 : index
    %26 = vector.load %arg9[%c0_17, %c0_18] : memref<16x32xbf16, #tpu.memory_space<vmem>>, vector<16x4xbf16>
    tpu.vector_store %arg9[%c0_17, %c0_18], %25 {strides = array<i32>} : memref<16x32xbf16, #tpu.memory_space<vmem>>, vector<16x4xbf16>,
    %27 = arith.mulf %19, %16 : vector<16x4xf32>
    %28 = arith.mulf %18, %17 : vector<16x4xf32>
    %29 = arith.addf %27, %28 : vector<16x4xf32>
    %30 = arith.truncf %29 : vector<16x4xf32> to vector<16x4xbf16>
    %c0_19 = arith.constant 0 : index
    %c4 = arith.constant 4 : index
    %31 = vector.load %arg9[%c0_19, %c4] : memref<16x32xbf16, #tpu.memory_space<vmem>>, vector<16x4xbf16>
    tpu.vector_store %arg9[%c0_19, %c4], %30 {strides = array<i32>} : memref<16x32xbf16, #tpu.memory_space<vmem>>, vector<16x4xbf16>,
    %32 = arith.mulf %20, %16 : vector<16x4xf32>
    %33 = arith.mulf %21, %17 : vector<16x4xf32>
    %34 = arith.subf %32, %33 : vector<16x4xf32>
    %35 = arith.truncf %34 : vector<16x4xf32> to vector<16x4xbf16>
    %c0_20 = arith.constant 0 : index
    %c0_21 = arith.constant 0 : index
    %36 = vector.load %arg10[%c0_20, %c0_21] : memref<16x32xbf16, #tpu.memory_space<vmem>>, vector<16x4xbf16>
    tpu.vector_store %arg10[%c0_20, %c0_21], %35 {strides = array<i32>} : memref<16x32xbf16, #tpu.memory_space<vmem>>, vector<16x4xbf16>,
    %37 = arith.mulf %21, %16 : vector<16x4xf32>
    %38 = arith.mulf %20, %17 : vector<16x4xf32>
    %39 = arith.addf %37, %38 : vector<16x4xf32>
    %40 = arith.truncf %39 : vector<16x4xf32> to vector<16x4xbf16>
    %c0_22 = arith.constant 0 : index
    %c4_23 = arith.constant 4 : index
    %41 = vector.load %arg10[%c0_22, %c4_23] : memref<16x32xbf16, #tpu.memory_space<vmem>>, vector<16x4xbf16>
    tpu.vector_store %arg10[%c0_22, %c4_23], %40 {strides = array<i32>} : memref<16x32xbf16, #tpu.memory_space<vmem>>, vector<16x4xbf16>,
    %42 = vector.extract_strided_slice %14 {offsets = [0, 8], sizes = [16, 4], strides = [1, 1]} : vector<16x32xf32> to vector<16x4xf32>
    %43 = vector.extract_strided_slice %15 {offsets = [0, 8], sizes = [16, 4], strides = [1, 1]} : vector<16x32xf32> to vector<16x4xf32>
    %44 = vector.extract_strided_slice %7 {offsets = [0, 8], sizes = [16, 4], strides = [1, 1]} : vector<16x32xf32> to vector<16x4xf32>
    %45 = vector.extract_strided_slice %7 {offsets = [0, 12], sizes = [16, 4], strides = [1, 1]} : vector<16x32xf32> to vector<16x4xf32>
    %46 = vector.extract_strided_slice %9 {offsets = [0, 8], sizes = [16, 4], strides = [1, 1]} : vector<16x32xf32> to vector<16x4xf32>
    %47 = vector.extract_strided_slice %9 {offsets = [0, 12], sizes = [16, 4], strides = [1, 1]} : vector<16x32xf32> to vector<16x4xf32>
    %48 = arith.mulf %44, %42 : vector<16x4xf32>
    %49 = arith.mulf %45, %43 : vector<16x4xf32>
    %50 = arith.subf %48, %49 : vector<16x4xf32>
    %51 = arith.truncf %50 : vector<16x4xf32> to vector<16x4xbf16>
    %c0_24 = arith.constant 0 : index
    %c8 = arith.constant 8 : index
    %52 = vector.load %arg9[%c0_24, %c8] : memref<16x32xbf16, #tpu.memory_space<vmem>>, vector<16x4xbf16>
    tpu.vector_store %arg9[%c0_24, %c8], %51 {strides = array<i32>} : memref<16x32xbf16, #tpu.memory_space<vmem>>, vector<16x4xbf16>,
    %53 = arith.mulf %45, %42 : vector<16x4xf32>
    %54 = arith.mulf %44, %43 : vector<16x4xf32>
    %55 = arith.addf %53, %54 : vector<16x4xf32>
    %56 = arith.truncf %55 : vector<16x4xf32> to vector<16x4xbf16>
    %c0_25 = arith.constant 0 : index
    %c12 = arith.constant 12 : index
    %57 = vector.load %arg9[%c0_25, %c12] : memref<16x32xbf16, #tpu.memory_space<vmem>>, vector<16x4xbf16>
    tpu.vector_store %arg9[%c0_25, %c12], %56 {strides = array<i32>} : memref<16x32xbf16, #tpu.memory_space<vmem>>, vector<16x4xbf16>,
    %58 = arith.mulf %46, %42 : vector<16x4xf32>
    %59 = arith.mulf %47, %43 : vector<16x4xf32>
    %60 = arith.subf %58, %59 : vector<16x4xf32>
    %61 = arith.truncf %60 : vector<16x4xf32> to vector<16x4xbf16>
    %c0_26 = arith.constant 0 : index
    %c8_27 = arith.constant 8 : index
    %62 = vector.load %arg10[%c0_26, %c8_27] : memref<16x32xbf16, #tpu.memory_space<vmem>>, vector<16x4xbf16>
    tpu.vector_store %arg10[%c0_26, %c8_27], %61 {strides = array<i32>} : memref<16x32xbf16, #tpu.memory_space<vmem>>, vector<16x4xbf16>,
    %63 = arith.mulf %47, %42 : vector<16x4xf32>
    %64 = arith.mulf %46, %43 : vector<16x4xf32>
    %65 = arith.addf %63, %64 : vector<16x4xf32>
    %66 = arith.truncf %65 : vector<16x4xf32> to vector<16x4xbf16>
    %c0_28 = arith.constant 0 : index
    %c12_29 = arith.constant 12 : index
    %67 = vector.load %arg10[%c0_28, %c12_29] : memref<16x32xbf16, #tpu.memory_space<vmem>>, vector<16x4xbf16>
    tpu.vector_store %arg10[%c0_28, %c12_29], %66 {strides = array<i32>} : memref<16x32xbf16, #tpu.memory_space<vmem>>, vector<16x4xbf16>,
    %68 = vector.extract_strided_slice %14 {offsets = [0, 16], sizes = [16, 4], strides = [1, 1]} : vector<16x32xf32> to vector<16x4xf32>
    %69 = vector.extract_strided_slice %15 {offsets = [0, 16], sizes = [16, 4], strides = [1, 1]} : vector<16x32xf32> to vector<16x4xf32>
    %70 = vector.extract_strided_slice %7 {offsets = [0, 16], sizes = [16, 4], strides = [1, 1]} : vector<16x32xf32> to vector<16x4xf32>
    %71 = vector.extract_strided_slice %7 {offsets = [0, 20], sizes = [16, 4], strides = [1, 1]} : vector<16x32xf32> to vector<16x4xf32>
    %72 = vector.extract_strided_slice %9 {offsets = [0, 16], sizes = [16, 4], strides = [1, 1]} : vector<16x32xf32> to vector<16x4xf32>
    %73 = vector.extract_strided_slice %9 {offsets = [0, 20], sizes = [16, 4], strides = [1, 1]} : vector<16x32xf32> to vector<16x4xf32>
    %74 = arith.mulf %70, %68 : vector<16x4xf32>
    %75 = arith.mulf %71, %69 : vector<16x4xf32>
    %76 = arith.subf %74, %75 : vector<16x4xf32>
    %77 = arith.truncf %76 : vector<16x4xf32> to vector<16x4xbf16>
    %c0_30 = arith.constant 0 : index
    %c16 = arith.constant 16 : index
    %78 = vector.load %arg9[%c0_30, %c16] : memref<16x32xbf16, #tpu.memory_space<vmem>>, vector<16x4xbf16>
    tpu.vector_store %arg9[%c0_30, %c16], %77 {strides = array<i32>} : memref<16x32xbf16, #tpu.memory_space<vmem>>, vector<16x4xbf16>,
    %79 = arith.mulf %71, %68 : vector<16x4xf32>
    %80 = arith.mulf %70, %69 : vector<16x4xf32>
    %81 = arith.addf %79, %80 : vector<16x4xf32>
    %82 = arith.truncf %81 : vector<16x4xf32> to vector<16x4xbf16>
    %c0_31 = arith.constant 0 : index
    %c20 = arith.constant 20 : index
    %83 = vector.load %arg9[%c0_31, %c20] : memref<16x32xbf16, #tpu.memory_space<vmem>>, vector<16x4xbf16>
    tpu.vector_store %arg9[%c0_31, %c20], %82 {strides = array<i32>} : memref<16x32xbf16, #tpu.memory_space<vmem>>, vector<16x4xbf16>,
    %84 = arith.mulf %72, %68 : vector<16x4xf32>
    %85 = arith.mulf %73, %69 : vector<16x4xf32>
    %86 = arith.subf %84, %85 : vector<16x4xf32>
    %87 = arith.truncf %86 : vector<16x4xf32> to vector<16x4xbf16>
    %c0_32 = arith.constant 0 : index
    %c16_33 = arith.constant 16 : index
    %88 = vector.load %arg10[%c0_32, %c16_33] : memref<16x32xbf16, #tpu.memory_space<vmem>>, vector<16x4xbf16>
    tpu.vector_store %arg10[%c0_32, %c16_33], %87 {strides = array<i32>} : memref<16x32xbf16, #tpu.memory_space<vmem>>, vector<16x4xbf16>,
    %89 = arith.mulf %73, %68 : vector<16x4xf32>
    %90 = arith.mulf %72, %69 : vector<16x4xf32>
    %91 = arith.addf %89, %90 : vector<16x4xf32>
    %92 = arith.truncf %91 : vector<16x4xf32> to vector<16x4xbf16>
    %c0_34 = arith.constant 0 : index
    %c20_35 = arith.constant 20 : index
    %93 = vector.load %arg10[%c0_34, %c20_35] : memref<16x32xbf16, #tpu.memory_space<vmem>>, vector<16x4xbf16>
    tpu.vector_store %arg10[%c0_34, %c20_35], %92 {strides = array<i32>} : memref<16x32xbf16, #tpu.memory_space<vmem>>, vector<16x4xbf16>,
    %94 = vector.extract_strided_slice %14 {offsets = [0, 24], sizes = [16, 4], strides = [1, 1]} : vector<16x32xf32> to vector<16x4xf32>
    %95 = vector.extract_strided_slice %15 {offsets = [0, 24], sizes = [16, 4], strides = [1, 1]} : vector<16x32xf32> to vector<16x4xf32>
    %96 = vector.extract_strided_slice %7 {offsets = [0, 24], sizes = [16, 4], strides = [1, 1]} : vector<16x32xf32> to vector<16x4xf32>
    %97 = vector.extract_strided_slice %7 {offsets = [0, 28], sizes = [16, 4], strides = [1, 1]} : vector<16x32xf32> to vector<16x4xf32>
    %98 = vector.extract_strided_slice %9 {offsets = [0, 24], sizes = [16, 4], strides = [1, 1]} : vector<16x32xf32> to vector<16x4xf32>
    %99 = vector.extract_strided_slice %9 {offsets = [0, 28], sizes = [16, 4], strides = [1, 1]} : vector<16x32xf32> to vector<16x4xf32>
    %100 = arith.mulf %96, %94 : vector<16x4xf32>
    %101 = arith.mulf %97, %95 : vector<16x4xf32>
    %102 = arith.subf %100, %101 : vector<16x4xf32>
    %103 = arith.truncf %102 : vector<16x4xf32> to vector<16x4xbf16>
    %c0_36 = arith.constant 0 : index
    %c24 = arith.constant 24 : index
    %104 = vector.load %arg9[%c0_36, %c24] : memref<16x32xbf16, #tpu.memory_space<vmem>>, vector<16x4xbf16>
    tpu.vector_store %arg9[%c0_36, %c24], %103 {strides = array<i32>} : memref<16x32xbf16, #tpu.memory_space<vmem>>, vector<16x4xbf16>,
    %105 = arith.mulf %97, %94 : vector<16x4xf32>
    %106 = arith.mulf %96, %95 : vector<16x4xf32>
    %107 = arith.addf %105, %106 : vector<16x4xf32>
    %108 = arith.truncf %107 : vector<16x4xf32> to vector<16x4xbf16>
    %c0_37 = arith.constant 0 : index
    %c28 = arith.constant 28 : index
    %109 = vector.load %arg9[%c0_37, %c28] : memref<16x32xbf16, #tpu.memory_space<vmem>>, vector<16x4xbf16>
    tpu.vector_store %arg9[%c0_37, %c28], %108 {strides = array<i32>} : memref<16x32xbf16, #tpu.memory_space<vmem>>, vector<16x4xbf16>,
    %110 = arith.mulf %98, %94 : vector<16x4xf32>
    %111 = arith.mulf %99, %95 : vector<16x4xf32>
    %112 = arith.subf %110, %111 : vector<16x4xf32>
    %113 = arith.truncf %112 : vector<16x4xf32> to vector<16x4xbf16>
    %c0_38 = arith.constant 0 : index
    %c24_39 = arith.constant 24 : index
    %114 = vector.load %arg10[%c0_38, %c24_39] : memref<16x32xbf16, #tpu.memory_space<vmem>>, vector<16x4xbf16>
    tpu.vector_store %arg10[%c0_38, %c24_39], %113 {strides = array<i32>} : memref<16x32xbf16, #tpu.memory_space<vmem>>, vector<16x4xbf16>,
    %115 = arith.mulf %99, %94 : vector<16x4xf32>
    %116 = arith.mulf %98, %95 : vector<16x4xf32>
    %117 = arith.addf %115, %116 : vector<16x4xf32>
    %118 = arith.truncf %117 : vector<16x4xf32> to vector<16x4xbf16>
    %c0_40 = arith.constant 0 : index
    %c28_41 = arith.constant 28 : index
    %119 = vector.load %arg10[%c0_40, %c28_41] : memref<16x32xbf16, #tpu.memory_space<vmem>>, vector<16x4xbf16>
    tpu.vector_store %arg10[%c0_40, %c28_41], %118 {strides = array<i32>} : memref<16x32xbf16, #tpu.memory_space<vmem>>, vector<16x4xbf16>,
    return
  }
  func.func @transform_0(%arg0: i32, %arg1: i32) -> (i32, i32) {
    %c0_i32 = arith.constant 0 : i32
    %c0_i32_0 = arith.constant 0 : i32
    return %arg0, %c0_i32 : i32, i32
  }
  func.func @transform_1(%arg0: i32, %arg1: i32) -> (i32, i32) {
    %c0_i32 = arith.constant 0 : i32
    %c0_i32_0 = arith.constant 0 : i32
    %c0_i32_1 = arith.constant 0 : i32
    return %c0_i32, %c0_i32_0 : i32, i32
  }
  func.func @transform_2(%arg0: i32, %arg1: i32) -> (i32, i32) {
    %c0_i32 = arith.constant 0 : i32
    return %arg0, %arg1 : i32, i32
  }
  func.func @transform_3(%arg0: i32, %arg1: i32) -> (i32, i32) {
    %c0_i32 = arith.constant 0 : i32
    return %arg0, %arg1 : i32, i32
  }
  func.func @transform_4(%arg0: i32, %arg1: i32) -> (i32, i32) {
    %c0_i32 = arith.constant 0 : i32
    %c0_i32_0 = arith.constant 0 : i32
    return %c0_i32, %arg1 : i32, i32
  }
  func.func @transform_5(%arg0: i32, %arg1: i32) -> (i32, i32) {
    %c0_i32 = arith.constant 0 : i32
    %c0_i32_0 = arith.constant 0 : i32
    return %c0_i32, %arg1 : i32, i32
  }
  func.func @transform_6(%arg0: i32, %arg1: i32) -> (i32, i32) {
    %c0_i32 = arith.constant 0 : i32
    %c0_i32_0 = arith.constant 0 : i32
    return %c0_i32, %arg1 : i32, i32
  }
  func.func @transform_7(%arg0: i32, %arg1: i32) -> (i32, i32) {
    %c0_i32 = arith.constant 0 : i32
    return %arg0, %arg1 : i32, i32
  }
  func.func @transform_8(%arg0: i32, %arg1: i32) -> (i32, i32) {
    %c0_i32 = arith.constant 0 : i32
    return %arg0, %arg1 : i32, i32
  }
  func.func @transform_9(%arg0: i32, %arg1: i32) -> (i32, i32) {
    %c0_i32 = arith.constant 0 : i32
    return %arg0, %arg1 : i32, i32
  }
}

</mosaic_0001>

<llo_original>
// kernel: tpu_custom_call.1
$region0: #{tpu_custom_call.1}
  #allocation0 [shape = 'u32[]', space=smem, size = 0x4, offset = 0x4, fixed_abs, tag = 'smem constant byte address 0x4 - core index']
  #allocation1 [shape = 'u32[144,128]{1,0:T(1,128)}', space=vmem, size = 0x12000, scoped, tag = 'internal scratch']
  #allocation2 [shape = 'bf16[16,32]{1,0:T(8,128)(2,1)}', space=vmem, size = 0x1000, scoped, tag = 'scratch operand']
  %s0 = inlined_call_operand.hbm [shape: f32[16,32], index: 0, kind: input, shape index: {}]
  %s1 = inlined_call_operand.vmem [shape: f32[1,32], index: 1, kind: input, shape index: {}]
  %s2 = inlined_call_operand.hbm [shape: f32[16,32], index: 2, kind: input, shape index: {}]
  %s3 = inlined_call_operand.hbm [shape: f32[16,32], index: 3, kind: input, shape index: {}]
  %s4 = inlined_call_operand.hbm [shape: bf16[32,32], index: 4, kind: input, shape index: {}]
  %s5 = inlined_call_operand.hbm [shape: bf16[32,32], index: 5, kind: input, shape index: {}]
  %s6 = inlined_call_operand.hbm [shape: bf16[32,32], index: 6, kind: input, shape index: {}]
  %s7 = inlined_call_operand.hbm [shape: bf16[16,32], index: 7, kind: output, shape index: {0}]
  %s8 = inlined_call_operand.hbm [shape: bf16[16,32], index: 8, kind: output, shape index: {1}]
  %s9 = inlined_call_operand.hbm [shape: bf16[16,32], index: 9, kind: output, shape index: {2}]
  %10 = xla_tuple %s7, %s8, %s9
  %s11 = sld [smem:[#allocation0]]
  $region82: #{tpu_custom_call.1} parent=0
    _
  %s13 = ssub.s32 1, %s11
  %s14 = scalar_select 0, %s13, %s11
  $region1: #{tpu_custom_call.1} parent=0
    #allocation3 [shape = 'u8[8192]{0}', space=vmem, size = 0x2000, scoped, tag = 'input window, operand 0, single buffered']
    #allocation4 [shape = 's32[1]{0}', space=sflag, size = 0x4, scoped, tag = 'scoped memory for tpu_custom_call.1']
    #allocation5 [shape = 's32[1]{0}', space=sflag, size = 0x4, scoped, tag = 'scoped memory for tpu_custom_call.1']
    #allocation6 [shape = 'u8[8192]{0}', space=vmem, size = 0x2000, scoped, tag = 'input window, operand 2, single buffered']
    #allocation7 [shape = 's32[1]{0}', space=sflag, size = 0x4, scoped, tag = 'scoped memory for tpu_custom_call.1']
    #allocation8 [shape = 'u8[8192]{0}', space=vmem, size = 0x2000, scoped, tag = 'input window, operand 3, single buffered']
    #allocation9 [shape = 'u8[8192]{0}', space=vmem, size = 0x2000, scoped, tag = 'input window, operand 4, single buffered']
    #allocation10 [shape = 's32[1]{0}', space=sflag, size = 0x4, scoped, tag = 'scoped memory for tpu_custom_call.1']
    #allocation11 [shape = 'u8[8192]{0}', space=vmem, size = 0x2000, scoped, tag = 'input window, operand 5, single buffered']
    #allocation12 [shape = 'u8[8192]{0}', space=vmem, size = 0x2000, scoped, tag = 'input window, operand 6, single buffered']
    #allocation13 [shape = 's32[1]{0}', space=sflag, size = 0x4, scoped, tag = 'scoped memory for tpu_custom_call.1']
    #allocation14 [shape = 'u8[4096]{0}', space=vmem, size = 0x1000, scoped, tag = 'output window, operand 0, single buffered']
    #allocation15 [shape = 'u8[4096]{0}', space=vmem, size = 0x1000, scoped, tag = 'output window, operand 1, single buffered']
    #allocation16 [shape = 's32[1]{0}', space=sflag, size = 0x4, scoped, tag = 'scoped memory for tpu_custom_call.1']
    #allocation17 [shape = 'u8[4096]{0}', space=vmem, size = 0x1000, scoped, tag = 'output window, operand 2, single buffered']
    %15 = vsyncpa [#allocation4], 0
    %16 = vsyncpa [#allocation7], 0
    %17 = vsyncpa [#allocation10], 0
    %18 = vsyncpa [#allocation13], 0
    %19 = vsyncpa [#allocation5], 0
    %20 = vsyncpa [#allocation16], 0
    // Predicated region
    $region2: #{tpu_custom_call.1} parent=1 // pred_check
      _
    $region3: #{tpu_custom_call.1} parent=1 // pred_check_branch
      %22 = sbr.rel (0) target = $region5
    $region4: #{tpu_custom_call.1} parent=1 // pred_region
      %s24 = ssub.s32 256, 256
      %25 = vsyncadd [#allocation4], %s24
      %s26 = sshll.u32 [#allocation3], 4
      %s27 = int_to_ptr.vmem [resolvable:$true] %s26
      %32 = dma.hbm_to_vmem [thread:$0]  %s0, 256, %s27, [#allocation4], 128, 128, 8
    $region5: #{tpu_custom_call.1} parent=1 // pred_fallthru
      _
    // Predicated region
    $region6: #{tpu_custom_call.1} parent=1 // pred_check
      _
    $region7: #{tpu_custom_call.1} parent=1 // pred_check_branch
      %34 = sbr.rel (0) target = $region9
    $region8: #{tpu_custom_call.1} parent=1 // pred_region
      _
    $region9: #{tpu_custom_call.1} parent=1 // pred_fallthru
      _
    // Predicated region
    $region10: #{tpu_custom_call.1} parent=1 // pred_check
      _
    $region11: #{tpu_custom_call.1} parent=1 // pred_check_branch
      %36 = sbr.rel (0) target = $region13
    $region12: #{tpu_custom_call.1} parent=1 // pred_region
      %s38 = ssub.s32 256, 256
      %39 = vsyncadd [#allocation7], %s38
      %s40 = sshll.u32 [#allocation6], 4
      %s41 = int_to_ptr.vmem [resolvable:$true] %s40
      %46 = dma.hbm_to_vmem [thread:$0]  %s2, 256, %s41, [#allocation7], 128, 128, 8
    $region13: #{tpu_custom_call.1} parent=1 // pred_fallthru
      _
    // Predicated region
    $region14: #{tpu_custom_call.1} parent=1 // pred_check
      _
    $region15: #{tpu_custom_call.1} parent=1 // pred_check_branch
      %48 = sbr.rel (0) target = $region17
    $region16: #{tpu_custom_call.1} parent=1 // pred_region
      %s50 = ssub.s32 256, 256
      %51 = vsyncadd [#allocation7], %s50
      %s52 = sshll.u32 [#allocation8], 4
      %s53 = int_to_ptr.vmem [resolvable:$true] %s52
      %58 = dma.hbm_to_vmem [thread:$0]  %s3, 256, %s53, [#allocation7], 128, 128, 8
    $region17: #{tpu_custom_call.1} parent=1 // pred_fallthru
      _
    // Predicated region
    $region18: #{tpu_custom_call.1} parent=1 // pred_check
      _
    $region19: #{tpu_custom_call.1} parent=1 // pred_check_branch
      %60 = sbr.rel (0) target = $region21
    $region20: #{tpu_custom_call.1} parent=1 // pred_region
      %s62 = ssub.s32 256, 256
      %63 = vsyncadd [#allocation10], %s62
      %s64 = sshll.u32 [#allocation9], 4
      %s65 = int_to_ptr.vmem [resolvable:$true] %s64
      %70 = dma.hbm_to_vmem [thread:$0]  %s4, 256, %s65, [#allocation10], 64, 64, 4
    $region21: #{tpu_custom_call.1} parent=1 // pred_fallthru
      _
    // Predicated region
    $region22: #{tpu_custom_call.1} parent=1 // pred_check
      _
    $region23: #{tpu_custom_call.1} parent=1 // pred_check_branch
      %72 = sbr.rel (0) target = $region25
    $region24: #{tpu_custom_call.1} parent=1 // pred_region
      %s74 = ssub.s32 256, 256
      %75 = vsyncadd [#allocation10], %s74
      %s76 = sshll.u32 [#allocation11], 4
      %s77 = int_to_ptr.vmem [resolvable:$true] %s76
      %82 = dma.hbm_to_vmem [thread:$0]  %s5, 256, %s77, [#allocation10], 64, 64, 4
    $region25: #{tpu_custom_call.1} parent=1 // pred_fallthru
      _
    // Predicated region
    $region26: #{tpu_custom_call.1} parent=1 // pred_check
      _
    $region27: #{tpu_custom_call.1} parent=1 // pred_check_branch
      %84 = sbr.rel (0) target = $region29
    $region28: #{tpu_custom_call.1} parent=1 // pred_region
      %s86 = ssub.s32 256, 256
      %87 = vsyncadd [#allocation13], %s86
      %s88 = sshll.u32 [#allocation12], 4
      %s89 = int_to_ptr.vmem [resolvable:$true] %s88
      %94 = dma.hbm_to_vmem [thread:$0]  %s6, 256, %s89, [#allocation13], 64, 64, 4
    $region29: #{tpu_custom_call.1} parent=1 // pred_fallthru
      _
    // Predicated region
    $region30: #{tpu_custom_call.1} parent=1 // pred_check
      _
    $region31: #{tpu_custom_call.1} parent=1 // pred_check_branch
      %96 = sbr.rel (0) target = $region33
    $region32: #{tpu_custom_call.1} parent=1 // pred_region
      %97 = dma.done [#allocation4], 256
    $region33: #{tpu_custom_call.1} parent=1 // pred_fallthru
      _
    // Predicated region
    $region34: #{tpu_custom_call.1} parent=1 // pred_check
      _
    $region35: #{tpu_custom_call.1} parent=1 // pred_check_branch
      %99 = sbr.rel (0) target = $region37
    $region36: #{tpu_custom_call.1} parent=1 // pred_region
      %100 = dma.done [#allocation7], 256
    $region37: #{tpu_custom_call.1} parent=1 // pred_fallthru
      _
    // Predicated region
    $region38: #{tpu_custom_call.1} parent=1 // pred_check
      _
    $region39: #{tpu_custom_call.1} parent=1 // pred_check_branch
      %102 = sbr.rel (0) target = $region41
    $region40: #{tpu_custom_call.1} parent=1 // pred_region
      %103 = dma.done [#allocation7], 256
    $region41: #{tpu_custom_call.1} parent=1 // pred_fallthru
      _
    // Predicated region
    $region42: #{tpu_custom_call.1} parent=1 // pred_check
      _
    $region43: #{tpu_custom_call.1} parent=1 // pred_check_branch
      %105 = sbr.rel (0) target = $region45
    $region44: #{tpu_custom_call.1} parent=1 // pred_region
      %106 = dma.done [#allocation10], 256
    $region45: #{tpu_custom_call.1} parent=1 // pred_fallthru
      _
    // Predicated region
    $region46: #{tpu_custom_call.1} parent=1 // pred_check
      _
    $region47: #{tpu_custom_call.1} parent=1 // pred_check_branch
      %108 = sbr.rel (0) target = $region49
    $region48: #{tpu_custom_call.1} parent=1 // pred_region
      %109 = dma.done [#allocation10], 256
    $region49: #{tpu_custom_call.1} parent=1 // pred_fallthru
      _
    // Predicated region
    $region50: #{tpu_custom_call.1} parent=1 // pred_check
      _
    $region51: #{tpu_custom_call.1} parent=1 // pred_check_branch
      %111 = sbr.rel (0) target = $region53
    $region52: #{tpu_custom_call.1} parent=1 // pred_region
      %112 = dma.done [#allocation13], 256
    $region53: #{tpu_custom_call.1} parent=1 // pred_fallthru
      _
    %p114 = scmp.eq.s32.totalorder 0, 0
    // Predicated region
    $region54: #{tpu_custom_call.1} parent=1 // pred_check
      %p115 = pneg %p114
    $region55: #{tpu_custom_call.1} parent=1 // pred_check_branch
      %117 = sbr.rel (%p115) target = $region57
    $region56: #{tpu_custom_call.1} parent=1 // pred_region
      %v118 = vld [vmem:[#allocation3] sm:$0xff]
      %v119 = vld [vmem:[#allocation3 + $0x8] sm:$0xff]
      %v120 = vmul.f32 %v118, %v118
      %v121 = vmul.f32 %v119, %v119
      %vm122 = vcmask 261120
      %v123 = vsel %vm122, %v120, 0.0
      %124 = vadd.xlane.f32.xlu0 %v123
      %v125 = vpop.xlane.xlu0 %124
      %v126 = vsel %vm122, %v121, 0.0
      %127 = vadd.xlane.f32.xlu0 %v126
      %v128 = vpop.xlane.xlu0 %127
      %v129 = vrcp.pop 32.0
      %v130 = vmul.f32 %v125, %v129
      %v131 = vmul.f32 %v128, %v129
      %v132 = vadd.f32 %v130, 1e-05
      %v133 = vadd.f32 %v131, 1e-05
      %v134 = vrsqrt.pop %v132
      %v135 = vrsqrt.pop %v133
      %v136 = vmul.f32 %v118, %v134
      %v137 = vmul.f32 %v119, %v135
      %v138 = vld [vmem:[%s1] sm:$0x1]
      %v140 = vlaneseq
      %v141 = vshrl.u32 %v140, 7
      %v142 = vsub.s32 0, %v141
      %v143 = vrot.slane %v138, %v142
      %v145 = vmul.f32 %v136, %v143
      %v146 = vmul.f32 %v137, %v143
      %v147 = vpack.c.bf16 %v146, %v145
      %v149 = vunpack.c.l.b16 %v147
      %v150 = vunpack.c.h.b16 %v147
      %v151 = vpack.c.b16 %v149, %v149
      %v152 = vpack.c.b16 %v150, %v150
      %vm155 = vcmask 257024
      %156 = vst.msk [vmem:[#allocation2] sm:$0xf] %vm155, %v151
      %157 = vst.msk [vmem:[#allocation2 + $0x4] sm:$0xf] %vm155, %v152
    $region57: #{tpu_custom_call.1} parent=1 // pred_fallthru
      _
    %v158 = vld [vmem:[#allocation2] sm:$0xf]
    %v159 = vld [vmem:[#allocation2 + $0x4] sm:$0xf]
    %v160 = vld [vmem:[#allocation9] sm:$0xf]
    %v161 = vld [vmem:[#allocation9 + $0x4] sm:$0xf]
    %v162 = vld [vmem:[#allocation9 + $0x8] sm:$0xf]
    %v163 = vld [vmem:[#allocation9 + $0xc] sm:$0xf]
    %v166 = vunpack.c.l.b16 %v158
    %v167 = vunpack.c.l.b16 %v159
    %v168 = vpack.c.b16 %v167, %v166
    %v173 = vunpack.c.l.b16 %v160
    %v174 = vunpack.c.l.b16 %v161
    %v175 = vunpack.c.l.b16 %v162
    %v176 = vunpack.c.l.b16 %v163
    %v177 = vpack.c.b16 %v174, %v173
    %v178 = vpack.c.b16 %v176, %v175
    %vm181 = vcmask 261120
    %v183 = vsel %vm181, %v168, 0
    %185 = vmatprep.subr.bf16.mxu0 0
    %186 = vmatpush1.bf16.msra.mxu0 0
    %187 = vmatprep.subr.bf16.mxu0 0
    %188 = vmatpush1.bf16.msra.mxu0 0
    %189 = vmatprep.subr.bf16.mxu0 0
    %190 = vmatpush1.bf16.msra.mxu0 0
    %191 = vmatprep.subr.bf16.mxu0 0
    %192 = vmatpush1.bf16.msra.mxu0 0
    %193 = vmatprep.subr.bf16.mxu0 0
    %194 = vmatpush1.bf16.msra.mxu0 0
    %195 = vmatprep.subr.bf16.mxu0 0
    %196 = vmatpush1.bf16.msra.mxu0 0
    %197 = vmatprep.subr.bf16.mxu0 0
    %198 = vmatpush1.bf16.msra.mxu0 %v178
    %199 = vmatprep.subr.bf16.mxu0 0
    %200 = vmatpush1.bf16.msra.mxu0 %v177
    %201 = vmatprep.subr.bf16.mxu0 0
    %202 = vmatpush2.bf16.msra.mxu0 0
    %203 = vmatprep.subr.bf16.mxu0 0
    %204 = vmatpush2.bf16.msra.mxu0 0
    %205 = vmatprep.subr.bf16.mxu0 0
    %206 = vmatpush2.bf16.msra.mxu0 0
    %207 = vmatprep.subr.bf16.mxu0 0
    %208 = vmatpush2.bf16.msra.mxu0 0
    %209 = vmatprep.subr.bf16.mxu0 0
    %210 = vmatpush2.bf16.msra.mxu0 0
    %211 = vmatprep.subr.bf16.mxu0 0
    %212 = vmatpush2.bf16.msra.mxu0 0
    %213 = vmatprep.subr.bf16.mxu0 0
    %214 = vmatpush2.bf16.msra.mxu0 0
    %215 = vmatprep.subr.bf16.mxu0 0
    %216 = vmatpush2.bf16.msra.mxu0 0
    %217 = vmatprep.mubr.bf16.mxu0 0
    %218 = vmatmul.mubr.bf16.gmra.mxu0 %v183
    %v219 = vpop.f32.mrf.mxu0
    %v220 = vadd.f32 0.0, %v219
    %v221 = vpop.f32.mrf.mxu0
    %v222 = vpop.f32.mrf.mxu0
    %v223 = vadd.f32 0.0, %v222
    %v224 = vpop.f32.mrf.mxu0
    %225 = vdwg.mxu0
    %v226 = vmul.f32 %v220, 0.35355338
    %v227 = vmul.f32 %v223, 0.35355338
    %v228 = vld [vmem:[#allocation11] sm:$0xf]
    %v229 = vld [vmem:[#allocation11 + $0x4] sm:$0xf]
    %v230 = vld [vmem:[#allocation11 + $0x8] sm:$0xf]
    %v231 = vld [vmem:[#allocation11 + $0xc] sm:$0xf]
    %v236 = vunpack.c.l.b16 %v228
    %v237 = vunpack.c.l.b16 %v229
    %v238 = vunpack.c.l.b16 %v230
    %v239 = vunpack.c.l.b16 %v231
    %v240 = vpack.c.b16 %v237, %v236
    %v241 = vpack.c.b16 %v239, %v238
    %244 = vmatprep.subr.bf16.mxu0 0
    %245 = vmatpush1.bf16.msra.mxu0 0
    %246 = vmatprep.subr.bf16.mxu0 0
    %247 = vmatpush1.bf16.msra.mxu0 0
    %248 = vmatprep.subr.bf16.mxu0 0
    %249 = vmatpush1.bf16.msra.mxu0 0
    %250 = vmatprep.subr.bf16.mxu0 0
    %251 = vmatpush1.bf16.msra.mxu0 0
    %252 = vmatprep.subr.bf16.mxu0 0
    %253 = vmatpush1.bf16.msra.mxu0 0
    %254 = vmatprep.subr.bf16.mxu0 0
    %255 = vmatpush1.bf16.msra.mxu0 0
    %256 = vmatprep.subr.bf16.mxu0 0
    %257 = vmatpush1.bf16.msra.mxu0 %v241
    %258 = vmatprep.subr.bf16.mxu0 0
    %259 = vmatpush1.bf16.msra.mxu0 %v240
    %260 = vmatprep.subr.bf16.mxu0 0
    %261 = vmatpush2.bf16.msra.mxu0 0
    %262 = vmatprep.subr.bf16.mxu0 0
    %263 = vmatpush2.bf16.msra.mxu0 0
    %264 = vmatprep.subr.bf16.mxu0 0
    %265 = vmatpush2.bf16.msra.mxu0 0
    %266 = vmatprep.subr.bf16.mxu0 0
    %267 = vmatpush2.bf16.msra.mxu0 0
    %268 = vmatprep.subr.bf16.mxu0 0
    %269 = vmatpush2.bf16.msra.mxu0 0
    %270 = vmatprep.subr.bf16.mxu0 0
    %271 = vmatpush2.bf16.msra.mxu0 0
    %272 = vmatprep.subr.bf16.mxu0 0
    %273 = vmatpush2.bf16.msra.mxu0 0
    %274 = vmatprep.subr.bf16.mxu0 0
    %275 = vmatpush2.bf16.msra.mxu0 0
    %276 = vmatprep.mubr.bf16.mxu0 0
    %277 = vmatmul.mubr.bf16.gmra.mxu0 %v183
    %v278 = vpop.f32.mrf.mxu0
    %v279 = vadd.f32 0.0, %v278
    %v280 = vpop.f32.mrf.mxu0
    %v281 = vpop.f32.mrf.mxu0
    %v282 = vadd.f32 0.0, %v281
    %v283 = vpop.f32.mrf.mxu0
    %284 = vdwg.mxu0
    %v285 = vld [vmem:[#allocation12] sm:$0xf]
    %v286 = vld [vmem:[#allocation12 + $0x4] sm:$0xf]
    %v287 = vld [vmem:[#allocation12 + $0x8] sm:$0xf]
    %v288 = vld [vmem:[#allocation12 + $0xc] sm:$0xf]
    %v293 = vunpack.c.l.b16 %v285
    %v294 = vunpack.c.l.b16 %v286
    %v295 = vunpack.c.l.b16 %v287
    %v296 = vunpack.c.l.b16 %v288
    %v297 = vpack.c.b16 %v294, %v293
    %v298 = vpack.c.b16 %v296, %v295
    %301 = vmatprep.subr.bf16.mxu0 0
    %302 = vmatpush1.bf16.msra.mxu0 0
    %303 = vmatprep.subr.bf16.mxu0 0
    %304 = vmatpush1.bf16.msra.mxu0 0
    %305 = vmatprep.subr.bf16.mxu0 0
    %306 = vmatpush1.bf16.msra.mxu0 0
    %307 = vmatprep.subr.bf16.mxu0 0
    %308 = vmatpush1.bf16.msra.mxu0 0
    %309 = vmatprep.subr.bf16.mxu0 0
    %310 = vmatpush1.bf16.msra.mxu0 0
    %311 = vmatprep.subr.bf16.mxu0 0
    %312 = vmatpush1.bf16.msra.mxu0 0
    %313 = vmatprep.subr.bf16.mxu0 0
    %314 = vmatpush1.bf16.msra.mxu0 %v298
    %315 = vmatprep.subr.bf16.mxu0 0
    %316 = vmatpush1.bf16.msra.mxu0 %v297
    %317 = vmatprep.subr.bf16.mxu0 0
    %318 = vmatpush2.bf16.msra.mxu0 0
    %319 = vmatprep.subr.bf16.mxu0 0
    %320 = vmatpush2.bf16.msra.mxu0 0
    %321 = vmatprep.subr.bf16.mxu0 0
    %322 = vmatpush2.bf16.msra.mxu0 0
    %323 = vmatprep.subr.bf16.mxu0 0
    %324 = vmatpush2.bf16.msra.mxu0 0
    %325 = vmatprep.subr.bf16.mxu0 0
    %326 = vmatpush2.bf16.msra.mxu0 0
    %327 = vmatprep.subr.bf16.mxu0 0
    %328 = vmatpush2.bf16.msra.mxu0 0
    %329 = vmatprep.subr.bf16.mxu0 0
    %330 = vmatpush2.bf16.msra.mxu0 0
    %331 = vmatprep.subr.bf16.mxu0 0
    %332 = vmatpush2.bf16.msra.mxu0 0
    %333 = vmatprep.mubr.bf16.mxu0 0
    %334 = vmatmul.mubr.bf16.gmra.mxu0 %v183
    %v335 = vpop.f32.mrf.mxu0
    %v336 = vadd.f32 0.0, %v335
    %v337 = vpop.f32.mrf.mxu0
    %v338 = vpop.f32.mrf.mxu0
    %v339 = vadd.f32 0.0, %v338
    %v340 = vpop.f32.mrf.mxu0
    %341 = vdwg.mxu0
    %v342 = vpack.c.bf16 %v339, %v336
    %v344 = vunpack.c.l.b16 %v342
    %v345 = vunpack.c.h.b16 %v342
    %v346 = vpack.c.b16 %v344, %v344
    %v347 = vpack.c.b16 %v345, %v345
    %vm350 = vcmask 257024
    %351 = vst.msk [vmem:[#allocation17] sm:$0xf] %vm350, %v346
    %352 = vst.msk [vmem:[#allocation17 + $0x4] sm:$0xf] %vm350, %v347
    %v353 = vld [vmem:[#allocation6] sm:$0xff]
    %v354 = vld [vmem:[#allocation6 + $0x8] sm:$0xff]
    %v355 = vld [vmem:[#allocation8] sm:$0xff]
    %v356 = vld [vmem:[#allocation8 + $0x8] sm:$0xff]
    %v357 = vmul.f32 %v226, %v353
    %v358 = vmul.f32 %v227, %v354
    %361 = vrot.lane.b32.xlu0 %v355, 4
    %v362 = vpop.permute.xlu0 %361
    %363 = vrot.lane.b32.xlu0 %v356, 4
    %v364 = vpop.permute.xlu0 %363
    %v367 = vmul.f32 %v226, %v362
    %v368 = vmul.f32 %v227, %v364
    %371 = vrot.lane.b32.xlu0 %v367, 124
    %v372 = vpop.permute.xlu0 %371
    %373 = vrot.lane.b32.xlu0 %v368, 124
    %v374 = vpop.permute.xlu0 %373
    %v377 = vsub.f32 %v357, %v372
    %v378 = vsub.f32 %v358, %v374
    %v379 = vpack.c.bf16 %v378, %v377
    %v381 = vunpack.c.l.b16 %v379
    %v382 = vunpack.c.h.b16 %v379
    %v383 = vpack.c.b16 %v381, %v381
    %v384 = vpack.c.b16 %v382, %v382
    %vm387 = vcmask 27648
    %388 = vst.msk [vmem:[#allocation14] sm:$0xf] %vm387, %v383
    %389 = vst.msk [vmem:[#allocation14 + $0x4] sm:$0xf] %vm387, %v384
    %392 = vrot.lane.b32.xlu0 %v353, 4
    %v393 = vpop.permute.xlu0 %392
    %394 = vrot.lane.b32.xlu0 %v354, 4
    %v395 = vpop.permute.xlu0 %394
    %v398 = vmul.f32 %v226, %v393
    %v399 = vmul.f32 %v227, %v395
    %v400 = vmul.f32 %v226, %v355
    %v401 = vmul.f32 %v227, %v356
    %404 = vrot.lane.b32.xlu0 %v400, 4
    %v405 = vpop.permute.xlu0 %404
    %406 = vrot.lane.b32.xlu0 %v401, 4
    %v407 = vpop.permute.xlu0 %406
    %v410 = vadd.f32 %v398, %v405
    %v411 = vadd.f32 %v399, %v407
    %v412 = vpack.c.bf16 %v411, %v410
    %v414 = vunpack.c.l.b16 %v412
    %v415 = vunpack.c.h.b16 %v412
    %v416 = vpack.c.b16 %v414, %v414
    %v417 = vpack.c.b16 %v415, %v415
    %vm420 = vcmask 60448
    %421 = vst.msk [vmem:[#allocation14] sm:$0xf] %vm420, %v416
    %422 = vst.msk [vmem:[#allocation14 + $0x4] sm:$0xf] %vm420, %v417
    %v423 = vmul.f32 %v279, %v353
    %v424 = vmul.f32 %v282, %v354
    %v425 = vmul.f32 %v279, %v362
    %v426 = vmul.f32 %v282, %v364
    %429 = vrot.lane.b32.xlu0 %v425, 124
    %v430 = vpop.permute.xlu0 %429
    %431 = vrot.lane.b32.xlu0 %v426, 124
    %v432 = vpop.permute.xlu0 %431
    %v435 = vsub.f32 %v423, %v430
    %v436 = vsub.f32 %v424, %v432
    %v437 = vpack.c.bf16 %v436, %v435
    %v439 = vunpack.c.l.b16 %v437
    %v440 = vunpack.c.h.b16 %v437
    %v441 = vpack.c.b16 %v439, %v439
    %v442 = vpack.c.b16 %v440, %v440
    %445 = vst.msk [vmem:[#allocation15] sm:$0xf] %vm387, %v441
    %446 = vst.msk [vmem:[#allocation15 + $0x4] sm:$0xf] %vm387, %v442
    %v447 = vmul.f32 %v279, %v393
    %v448 = vmul.f32 %v282, %v395
    %v449 = vmul.f32 %v279, %v355
    %v450 = vmul.f32 %v282, %v356
    %453 = vrot.lane.b32.xlu0 %v449, 4
    %v454 = vpop.permute.xlu0 %453
    %455 = vrot.lane.b32.xlu0 %v450, 4
    %v456 = vpop.permute.xlu0 %455
    %v459 = vadd.f32 %v447, %v454
    %v460 = vadd.f32 %v448, %v456
    %v461 = vpack.c.bf16 %v460, %v459
    %v463 = vunpack.c.l.b16 %v461
    %v464 = vunpack.c.h.b16 %v461
    %v465 = vpack.c.b16 %v463, %v463
    %v466 = vpack.c.b16 %v464, %v464
    %469 = vst.msk [vmem:[#allocation15] sm:$0xf] %vm420, %v465
    %470 = vst.msk [vmem:[#allocation15 + $0x4] sm:$0xf] %vm420, %v466
    %vm471 = vcmask 93248
    %472 = vst.msk [vmem:[#allocation14] sm:$0xf] %vm471, %v383
    %473 = vst.msk [vmem:[#allocation14 + $0x4] sm:$0xf] %vm471, %v384
    %vm474 = vcmask 126048
    %475 = vst.msk [vmem:[#allocation14] sm:$0xf] %vm474, %v416
    %476 = vst.msk [vmem:[#allocation14 + $0x4] sm:$0xf] %vm474, %v417
    %477 = vst.msk [vmem:[#allocation15] sm:$0xf] %vm471, %v441
    %478 = vst.msk [vmem:[#allocation15 + $0x4] sm:$0xf] %vm471, %v442
    %479 = vst.msk [vmem:[#allocation15] sm:$0xf] %vm474, %v465
    %480 = vst.msk [vmem:[#allocation15 + $0x4] sm:$0xf] %vm474, %v466
    %vm481 = vcmask 158848
    %482 = vst.msk [vmem:[#allocation14] sm:$0xf] %vm481, %v383
    %483 = vst.msk [vmem:[#allocation14 + $0x4] sm:$0xf] %vm481, %v384
    %vm484 = vcmask 191648
    %485 = vst.msk [vmem:[#allocation14] sm:$0xf] %vm484, %v416
    %486 = vst.msk [vmem:[#allocation14 + $0x4] sm:$0xf] %vm484, %v417
    %487 = vst.msk [vmem:[#allocation15] sm:$0xf] %vm481, %v441
    %488 = vst.msk [vmem:[#allocation15 + $0x4] sm:$0xf] %vm481, %v442
    %489 = vst.msk [vmem:[#allocation15] sm:$0xf] %vm484, %v465
    %490 = vst.msk [vmem:[#allocation15 + $0x4] sm:$0xf] %vm484, %v466
    %vm491 = vcmask 224448
    %492 = vst.msk [vmem:[#allocation14] sm:$0xf] %vm491, %v383
    %493 = vst.msk [vmem:[#allocation14 + $0x4] sm:$0xf] %vm491, %v384
    %vm494 = vcmask 257248
    %495 = vst.msk [vmem:[#allocation14] sm:$0xf] %vm494, %v416
    %496 = vst.msk [vmem:[#allocation14 + $0x4] sm:$0xf] %vm494, %v417
    %497 = vst.msk [vmem:[#allocation15] sm:$0xf] %vm491, %v441
    %498 = vst.msk [vmem:[#allocation15 + $0x4] sm:$0xf] %vm491, %v442
    %499 = vst.msk [vmem:[#allocation15] sm:$0xf] %vm494, %v465
    %500 = vst.msk [vmem:[#allocation15 + $0x4] sm:$0xf] %vm494, %v466
    // Predicated region
    $region58: #{tpu_custom_call.1} parent=1 // pred_check
      _
    $region59: #{tpu_custom_call.1} parent=1 // pred_check_branch
      %502 = sbr.rel (0) target = $region61
    $region60: #{tpu_custom_call.1} parent=1 // pred_region
      %s504 = ssub.s32 128, 128
      %505 = vsyncadd [#allocation5], %s504
      %s506 = sshll.u32 [#allocation14], 4
      %s507 = int_to_ptr.vmem [resolvable:$true] %s506
      %512 = dma.vmem_to_hbm [thread:$0]  %s507, 128, %s7, [#allocation5], 64, 64, 4
    $region61: #{tpu_custom_call.1} parent=1 // pred_fallthru
      _
    // Predicated region
    $region62: #{tpu_custom_call.1} parent=1 // pred_check
      _
    $region63: #{tpu_custom_call.1} parent=1 // pred_check_branch
      %514 = sbr.rel (0) target = $region65
    $region64: #{tpu_custom_call.1} parent=1 // pred_region
      %s516 = ssub.s32 128, 128
      %517 = vsyncadd [#allocation16], %s516
      %s518 = sshll.u32 [#allocation15], 4
      %s519 = int_to_ptr.vmem [resolvable:$true] %s518
      %524 = dma.vmem_to_hbm [thread:$0]  %s519, 128, %s8, [#allocation16], 64, 64, 4
    $region65: #{tpu_custom_call.1} parent=1 // pred_fallthru
      _
    // Predicated region
    $region66: #{tpu_custom_call.1} parent=1 // pred_check
      _
    $region67: #{tpu_custom_call.1} parent=1 // pred_check_branch
      %526 = sbr.rel (0) target = $region69
    $region68: #{tpu_custom_call.1} parent=1 // pred_region
      %s528 = ssub.s32 128, 128
      %529 = vsyncadd [#allocation16], %s528
      %s530 = sshll.u32 [#allocation17], 4
      %s531 = int_to_ptr.vmem [resolvable:$true] %s530
      %536 = dma.vmem_to_hbm [thread:$0]  %s531, 128, %s9, [#allocation16], 64, 64, 4
    $region69: #{tpu_custom_call.1} parent=1 // pred_fallthru
      _
    // Predicated region
    $region70: #{tpu_custom_call.1} parent=1 // pred_check
      _
    $region71: #{tpu_custom_call.1} parent=1 // pred_check_branch
      %538 = sbr.rel (0) target = $region73
    $region72: #{tpu_custom_call.1} parent=1 // pred_region
      %539 = dma.done [#allocation5], 128
    $region73: #{tpu_custom_call.1} parent=1 // pred_fallthru
      _
    // Predicated region
    $region74: #{tpu_custom_call.1} parent=1 // pred_check
      _
    $region75: #{tpu_custom_call.1} parent=1 // pred_check_branch
      %541 = sbr.rel (0) target = $region77
    $region76: #{tpu_custom_call.1} parent=1 // pred_region
      %542 = dma.done [#allocation16], 128
    $region77: #{tpu_custom_call.1} parent=1 // pred_fallthru
      _
    // Predicated region
    $region78: #{tpu_custom_call.1} parent=1 // pred_check
      _
    $region79: #{tpu_custom_call.1} parent=1 // pred_check_branch
      %544 = sbr.rel (0) target = $region81
    $region80: #{tpu_custom_call.1} parent=1 // pred_region
      %545 = dma.done [#allocation16], 128
    $region81: #{tpu_custom_call.1} parent=1 // pred_fallthru
      _
    %546 = vsyncpa [#allocation4], 1
    %547 = vsyncpa [#allocation7], 1
    %548 = vsyncpa [#allocation10], 1
    %549 = vsyncpa [#allocation13], 1
    %550 = vsyncpa [#allocation5], 1
    %551 = vsyncpa [#allocation16], 1

</llo_original>
